<compile_context>
chip_gen: v7x
topology: tpu7x:2x2x1
jax: 0.10.0
libtpu: 0.0.40
codegen_flags: <defaults>
</compile_context>

<pallas_src>
import functools

import jax
import jax.numpy as jnp
from jax.experimental import pallas as pl
from jax.experimental.pallas import tpu as pltpu


def _round_up(x, m):
    return (x + m - 1) // m * m


def _pick_batch_tile(B, cout, cin_pad, k_pad, l_in, l_out,
                     max_width=4096, vmem_budget=8 * 1024 * 1024):
    """Largest divisor of B whose per-step footprint stays comfortably small.

    Fewer, wider grid steps = fewer MXU weight pushes + less per-step overhead.
    """
    best = 1
    for bt in range(1, B + 1):
        if B % bt:
            continue
        width = bt * l_out
        vmem = (2 * bt * cin_pad * l_in * 4      # double-buffered input blocks
                + k_pad * width * 2              # bf16 im2col scratch
                + 2 * bt * cout * l_out * 4)     # double-buffered output blocks
        if width <= max_width and vmem <= vmem_budget:
            best = bt
    return best


def _lrelu_conv_kernel(x_ref, w_ref, b_ref, o_ref, patch_ref, *,
                       tap_offsets, group, cin_pad, bt, l_out, stride, slope):
    """One grid step processes `bt` batch images.

    x_ref     : (bt, cin_pad, l_in)   f32 flattened reflection-padded input (VMEM)
    w_ref     : (Cout, K_pad)         bf16 flattened conv weights (VMEM)
    b_ref     : (Cout, 1)             f32 bias (VMEM)
    o_ref     : (bt, Cout, l_out)     lane-dense output slab (l_out % 128 == 0)
    patch_ref : (K_pad, bt*l_out)     bf16 im2col staging scratch (VMEM)
    """
    rows = group * cin_pad                       # rows per store (multiple of 16)
    n_groups = len(tap_offsets) // group

    # ---- im2col staging: aligned, full-tile bf16 stores ---------------------
    for b in range(bt):
        lane0 = b * l_out
        for g in range(n_groups):
            parts = []
            for t in range(group):
                off = tap_offsets[g * group + t]
                if stride == 1:
                    parts.append(x_ref[b, :, pl.ds(off, l_out)])
                else:
                    # TODO(synk): stride > 1 (lane-strided loads + flat-q mapping)
                    # is not exercised by the shipped config; validate per Mosaic
                    # generation before enabling.
                    parts.append(x_ref[b, :, pl.ds(off, l_out, stride)])
            blk = parts[0] if group == 1 else jnp.concatenate(parts, axis=0)
            patch_ref[g * rows:(g + 1) * rows, lane0:lane0 + l_out] = (
                blk.astype(patch_ref.dtype))

    # ---- one wide bf16 MXU matmul over all bt images ------------------------
    acc = jnp.dot(w_ref[...], patch_ref[...],
                  preferred_element_type=jnp.float32)        # (Cout, bt*l_out) f32
    acc = acc + b_ref[...]                                   # bias broadcast (f32)
    y = jnp.maximum(acc, slope * acc)                        # LeakyReLU: vmul+vmax

    for b in range(bt):                                      # lane-dense f32 stores
        o_ref[b] = y[:, b * l_out:(b + 1) * l_out].astype(o_ref.dtype)


def leaky_relu_conv2d(x_nchw, weight_oihw, bias, *, stride=1, padding=0, slope=0.01):
    """Forward pass of LeakyReLUConv2d.

    x_nchw      : (B, Cin, H, W)  float32
    weight_oihw : (Cout, Cin, KH, KW)
    bias        : (Cout,)
    returns     : (B, Cout, Ho, Wo)
    """
    B, Cin, H, W = x_nchw.shape
    Cout, _, KH, KW = weight_oihw.shape

    # ---- reflection pad kept in NCHW: no layout transposes anywhere ----
    if padding > 0:
        x_pad = jnp.pad(
            x_nchw, ((0, 0), (0, 0), (padding, padding), (padding, padding)),
            mode="reflect")
    else:
        x_pad = x_nchw
    Hp, Wp = H + 2 * padding, W + 2 * padding
    Ho = (Hp - KH) // stride + 1
    Wo = (Wp - KW) // stride + 1

    # Flat-spatial formulation: each image's output is a (Cout, Ho*Wp) slab
    # (column q = i*Wp + j; columns with j >= Wo are garbage and sliced off).
    # Pad the slab width to a multiple of 128 so every store is a full vst.
    l_valid = Ho * Wp
    l_out = _round_up(l_valid, 128)
    max_off = (KH - 1) * Wp + (KW - 1)
    l_in = _round_up(max(Hp * Wp, max_off + stride * (l_out - 1) + 1), 128)

    # Sublane alignment: pad Cin to a multiple of 8.  ONE fused pad does both the
    # channel pad and the flat-spatial tail pad (keeps all tap reads in bounds —
    # the garbage columns only ever read these zero-filled tail lanes).
    cin_pad = max(8, _round_up(Cin, 8))
    x_flat = x_pad.reshape(B, Cin, Hp * Wp)
    x_flat = jnp.pad(x_flat, ((0, 0), (0, cin_pad - Cin), (0, l_in - Hp * Wp)))

    # bf16 sublane tile is 16 rows: group taps so each store is a full bf16 tile.
    # Odd tap counts get a "ghost" tap (offset 0) with zero weight columns.
    group = 1 if cin_pad % 16 == 0 else 2
    taps = [(kh, kw) for kh in range(KH) for kw in range(KW)]
    n_taps = len(taps)
    n_taps_pad = _round_up(n_taps, group)
    tap_offsets = tuple(kh * Wp + kw for kh, kw in taps) + (0,) * (n_taps_pad - n_taps)
    k_pad = n_taps_pad * cin_pad

    # Flatten weights to (Cout, K_pad) bf16, K ordered (kh, kw, cin_pad) to match
    # the im2col rows; zero columns for pad channels and ghost taps.
    w_k = jnp.transpose(weight_oihw, (0, 2, 3, 1))           # (Cout, KH, KW, Cin)
    w_k = jnp.pad(w_k, ((0, 0), (0, 0), (0, 0), (0, cin_pad - Cin)))
    w_flat = w_k.reshape(Cout, n_taps * cin_pad)
    w_flat = jnp.pad(w_flat, ((0, 0), (0, k_pad - n_taps * cin_pad)))
    w_flat = w_flat.astype(jnp.bfloat16)
    b_col = bias.reshape(Cout, 1).astype(jnp.float32)

    bt = _pick_batch_tile(B, Cout, cin_pad, k_pad, l_in, l_out)
    grid = (B // bt,)

    kernel = functools.partial(
        _lrelu_conv_kernel, tap_offsets=tap_offsets, group=group, cin_pad=cin_pad,
        bt=bt, l_out=l_out, stride=stride, slope=slope)

    cost = pl.CostEstimate(
        flops=2 * B * Cout * (KH * KW * Cin) * (Ho * Wo),
        transcendentals=0,
        bytes_accessed=int(x_nchw.size + weight_oihw.size + bias.size
                           + B * Cout * Ho * Wo) * 4)

    out_flat = pl.pallas_call(
        kernel,
        out_shape=jax.ShapeDtypeStruct((B, Cout, l_out), x_nchw.dtype),
        grid_spec=pltpu.PrefetchScalarGridSpec(
            num_scalar_prefetch=0,
            grid=grid,
            in_specs=[
                pl.BlockSpec((bt, cin_pad, l_in), lambda g: (g, 0, 0)),
                pl.BlockSpec((Cout, k_pad), lambda g: (0, 0)),
                pl.BlockSpec((Cout, 1), lambda g: (0, 0)),
            ],
            out_specs=pl.BlockSpec((bt, Cout, l_out), lambda g: (g, 0, 0)),
            scratch_shapes=[pltpu.VMEM((k_pad, bt * l_out), jnp.bfloat16)],
        ),
        compiler_params=pltpu.CompilerParams(dimension_semantics=("parallel",)),
        cost_estimate=cost,
    )(x_flat, w_flat, b_col)

    # Drop garbage columns; reshape is metadata-only; the W-crop is a strided
    # slice (one output-sized XLA copy) — fine at these sizes.
    out = out_flat[:, :, :l_valid].reshape(B, Cout, Ho, Wp)[:, :, :, :Wo]
    return out


if __name__ == "__main__":
    # Module config (small, consistent with the PyTorch __init__):
    n_in, n_out, kernel_size, stride, padding = 4, 8, 3, 1, 1
    B, H, W = 2, 16, 16

    key = jax.random.PRNGKey(0)
    kx, kw, kb = jax.random.split(key, 3)

    x = jax.random.normal(kx, (B, n_in, H, W), dtype=jnp.float32)
    # gaussian_weights_init: Conv weights ~ N(0, 0.02)
    weight = 0.02 * jax.random.normal(
        kw, (n_out, n_in, kernel_size, kernel_size), dtype=jnp.float32)
    bound = 1.0 / jnp.sqrt(n_in * kernel_size * kernel_size)
    bias = jax.random.uniform(kb, (n_out,), minval=-bound, maxval=bound,
                              dtype=jnp.float32)

    out = leaky_relu_conv2d(x, weight, bias, stride=stride, padding=padding)
    out = jax.block_until_ready(out)
    assert out.shape == (B, n_out, H, W), out.shape

    # ---- references (ReflectionPad -> conv -> bias -> LeakyReLU(0.01)) ----
    def ref_forward(x_in, w_in):
        x_p = jnp.pad(x_in, ((0, 0), (0, 0), (padding, padding), (padding, padding)),
                      mode="reflect")
        y = jax.lax.conv_general_dilated(
            x_p, w_in, (stride, stride), "VALID",
            dimension_numbers=("NCHW", "OIHW", "NCHW"),
            precision=jax.lax.Precision.HIGHEST) + bias[None, :, None, None]
        return jnp.maximum(y, 0.01 * y)

    ref_f32 = ref_forward(x, weight)
    # bf16-matched reference: same input rounding as the kernel's bf16 MXU feed.
    ref_bf16 = ref_forward(x.astype(jnp.bfloat16).astype(jnp.float32),
                           weight.astype(jnp.bfloat16).astype(jnp.float32))

    err_bf16 = float(jnp.max(jnp.abs(out - ref_bf16)))
    err_f32 = float(jnp.max(jnp.abs(out - ref_f32)))
    assert jnp.allclose(out, ref_bf16, atol=1e-4, rtol=1e-4), err_bf16
    assert jnp.allclose(out, ref_f32, atol=2e-2, rtol=2e-2), err_f32

    print("KERNEL_OK")
</pallas_src>

<mosaic_0001>
module attributes {stable_mosaic.version = 11 : i64} {
  func.func @_lrelu_conv_kernel(%arg0: i32, %arg1: memref<2x8x512xf32, #tpu.memory_space<vmem>>, %arg2: memref<8x80xbf16, #tpu.memory_space<vmem>>, %arg3: memref<8x1xf32, #tpu.memory_space<vmem>>, %arg4: memref<2x8x384xf32, #tpu.memory_space<vmem>>, %arg5: memref<80x768xbf16, #tpu.memory_space<vmem>>) attributes {dimension_semantics = [#tpu.dimension_semantics<parallel>], iteration_bounds = array<i64: 1>, scalar_prefetch = 0 : i64, scratch_operands = 1 : i64, tpu.core_type = #tpu.core_type<tc>, window_params = [{transform_indices = @transform_0, window_bounds = array<i64: 2, 8, 512>}, {pipeline_mode = #tpu.pipeline_mode<synchronous>, transform_indices = @transform_1, window_bounds = array<i64: 8, 80>}, {pipeline_mode = #tpu.pipeline_mode<synchronous>, transform_indices = @transform_2, window_bounds = array<i64: 8, 1>}, {transform_indices = @transform_3, window_bounds = array<i64: 2, 8, 384>}]} {
    %c0 = arith.constant 0 : index
    %c0_0 = arith.constant 0 : index
    %c0_1 = arith.constant 0 : index
    %0 = vector.load %arg1[%c0, %c0_0, %c0_1] : memref<2x8x512xf32, #tpu.memory_space<vmem>>, vector<1x8x384xf32>
    %1 = vector.shape_cast %0 : vector<1x8x384xf32> to vector<8x384xf32>
    %c0_2 = arith.constant 0 : index
    %c0_3 = arith.constant 0 : index
    %c1 = arith.constant 1 : index
    %2 = vector.load %arg1[%c0_2, %c0_3, %c1] : memref<2x8x512xf32, #tpu.memory_space<vmem>>, vector<1x8x384xf32>
    %3 = vector.shape_cast %2 : vector<1x8x384xf32> to vector<8x384xf32>
    %4 = tpu.concatenate %1, %3 in 0 : vector<8x384xf32>, vector<8x384xf32> -> vector<16x384xf32>
    %5 = arith.truncf %4 : vector<16x384xf32> to vector<16x384xbf16>
    %c0_4 = arith.constant 0 : index
    %c0_5 = arith.constant 0 : index
    %6 = vector.load %arg5[%c0_4, %c0_5] : memref<80x768xbf16, #tpu.memory_space<vmem>>, vector<16x384xbf16>
    tpu.vector_store %arg5[%c0_4, %c0_5], %5 {strides = array<i32>} : memref<80x768xbf16, #tpu.memory_space<vmem>>, vector<16x384xbf16>,
    %c0_6 = arith.constant 0 : index
    %c0_7 = arith.constant 0 : index
    %c2 = arith.constant 2 : index
    %7 = vector.load %arg1[%c0_6, %c0_7, %c2] : memref<2x8x512xf32, #tpu.memory_space<vmem>>, vector<1x8x384xf32>
    %8 = vector.shape_cast %7 : vector<1x8x384xf32> to vector<8x384xf32>
    %c0_8 = arith.constant 0 : index
    %c0_9 = arith.constant 0 : index
    %c18 = arith.constant 18 : index
    %9 = vector.load %arg1[%c0_8, %c0_9, %c18] : memref<2x8x512xf32, #tpu.memory_space<vmem>>, vector<1x8x384xf32>
    %10 = vector.shape_cast %9 : vector<1x8x384xf32> to vector<8x384xf32>
    %11 = tpu.concatenate %8, %10 in 0 : vector<8x384xf32>, vector<8x384xf32> -> vector<16x384xf32>
    %12 = arith.truncf %11 : vector<16x384xf32> to vector<16x384xbf16>
    %c16 = arith.constant 16 : index
    %c0_10 = arith.constant 0 : index
    %13 = vector.load %arg5[%c16, %c0_10] : memref<80x768xbf16, #tpu.memory_space<vmem>>, vector<16x384xbf16>
    tpu.vector_store %arg5[%c16, %c0_10], %12 {strides = array<i32>} : memref<80x768xbf16, #tpu.memory_space<vmem>>, vector<16x384xbf16>,
    %c0_11 = arith.constant 0 : index
    %c0_12 = arith.constant 0 : index
    %c19 = arith.constant 19 : index
    %14 = vector.load %arg1[%c0_11, %c0_12, %c19] : memref<2x8x512xf32, #tpu.memory_space<vmem>>, vector<1x8x384xf32>
    %15 = vector.shape_cast %14 : vector<1x8x384xf32> to vector<8x384xf32>
    %c0_13 = arith.constant 0 : index
    %c0_14 = arith.constant 0 : index
    %c20 = arith.constant 20 : index
    %16 = vector.load %arg1[%c0_13, %c0_14, %c20] : memref<2x8x512xf32, #tpu.memory_space<vmem>>, vector<1x8x384xf32>
    %17 = vector.shape_cast %16 : vector<1x8x384xf32> to vector<8x384xf32>
    %18 = tpu.concatenate %15, %17 in 0 : vector<8x384xf32>, vector<8x384xf32> -> vector<16x384xf32>
    %19 = arith.truncf %18 : vector<16x384xf32> to vector<16x384xbf16>
    %c32 = arith.constant 32 : index
    %c0_15 = arith.constant 0 : index
    %20 = vector.load %arg5[%c32, %c0_15] : memref<80x768xbf16, #tpu.memory_space<vmem>>, vector<16x384xbf16>
    tpu.vector_store %arg5[%c32, %c0_15], %19 {strides = array<i32>} : memref<80x768xbf16, #tpu.memory_space<vmem>>, vector<16x384xbf16>,
    %c0_16 = arith.constant 0 : index
    %c0_17 = arith.constant 0 : index
    %c36 = arith.constant 36 : index
    %21 = vector.load %arg1[%c0_16, %c0_17, %c36] : memref<2x8x512xf32, #tpu.memory_space<vmem>>, vector<1x8x384xf32>
    %22 = vector.shape_cast %21 : vector<1x8x384xf32> to vector<8x384xf32>
    %c0_18 = arith.constant 0 : index
    %c0_19 = arith.constant 0 : index
    %c37 = arith.constant 37 : index
    %23 = vector.load %arg1[%c0_18, %c0_19, %c37] : memref<2x8x512xf32, #tpu.memory_space<vmem>>, vector<1x8x384xf32>
    %24 = vector.shape_cast %23 : vector<1x8x384xf32> to vector<8x384xf32>
    %25 = tpu.concatenate %22, %24 in 0 : vector<8x384xf32>, vector<8x384xf32> -> vector<16x384xf32>
    %26 = arith.truncf %25 : vector<16x384xf32> to vector<16x384xbf16>
    %c48 = arith.constant 48 : index
    %c0_20 = arith.constant 0 : index
    %27 = vector.load %arg5[%c48, %c0_20] : memref<80x768xbf16, #tpu.memory_space<vmem>>, vector<16x384xbf16>
    tpu.vector_store %arg5[%c48, %c0_20], %26 {strides = array<i32>} : memref<80x768xbf16, #tpu.memory_space<vmem>>, vector<16x384xbf16>,
    %c0_21 = arith.constant 0 : index
    %c0_22 = arith.constant 0 : index
    %c38 = arith.constant 38 : index
    %28 = vector.load %arg1[%c0_21, %c0_22, %c38] : memref<2x8x512xf32, #tpu.memory_space<vmem>>, vector<1x8x384xf32>
    %29 = vector.shape_cast %28 : vector<1x8x384xf32> to vector<8x384xf32>
    %c0_23 = arith.constant 0 : index
    %c0_24 = arith.constant 0 : index
    %c0_25 = arith.constant 0 : index
    %30 = vector.load %arg1[%c0_23, %c0_24, %c0_25] : memref<2x8x512xf32, #tpu.memory_space<vmem>>, vector<1x8x384xf32>
    %31 = vector.shape_cast %30 : vector<1x8x384xf32> to vector<8x384xf32>
    %32 = tpu.concatenate %29, %31 in 0 : vector<8x384xf32>, vector<8x384xf32> -> vector<16x384xf32>
    %33 = arith.truncf %32 : vector<16x384xf32> to vector<16x384xbf16>
    %c64 = arith.constant 64 : index
    %c0_26 = arith.constant 0 : index
    %34 = vector.load %arg5[%c64, %c0_26] : memref<80x768xbf16, #tpu.memory_space<vmem>>, vector<16x384xbf16>
    tpu.vector_store %arg5[%c64, %c0_26], %33 {strides = array<i32>} : memref<80x768xbf16, #tpu.memory_space<vmem>>, vector<16x384xbf16>,
    %c1_27 = arith.constant 1 : index
    %c0_28 = arith.constant 0 : index
    %c0_29 = arith.constant 0 : index
    %35 = vector.load %arg1[%c1_27, %c0_28, %c0_29] : memref<2x8x512xf32, #tpu.memory_space<vmem>>, vector<1x8x384xf32>
    %36 = vector.shape_cast %35 : vector<1x8x384xf32> to vector<8x384xf32>
    %c1_30 = arith.constant 1 : index
    %c0_31 = arith.constant 0 : index
    %c1_32 = arith.constant 1 : index
    %37 = vector.load %arg1[%c1_30, %c0_31, %c1_32] : memref<2x8x512xf32, #tpu.memory_space<vmem>>, vector<1x8x384xf32>
    %38 = vector.shape_cast %37 : vector<1x8x384xf32> to vector<8x384xf32>
    %39 = tpu.concatenate %36, %38 in 0 : vector<8x384xf32>, vector<8x384xf32> -> vector<16x384xf32>
    %40 = arith.truncf %39 : vector<16x384xf32> to vector<16x384xbf16>
    %c0_33 = arith.constant 0 : index
    %c384 = arith.constant 384 : index
    %41 = vector.load %arg5[%c0_33, %c384] : memref<80x768xbf16, #tpu.memory_space<vmem>>, vector<16x384xbf16>
    tpu.vector_store %arg5[%c0_33, %c384], %40 {strides = array<i32>} : memref<80x768xbf16, #tpu.memory_space<vmem>>, vector<16x384xbf16>,
    %c1_34 = arith.constant 1 : index
    %c0_35 = arith.constant 0 : index
    %c2_36 = arith.constant 2 : index
    %42 = vector.load %arg1[%c1_34, %c0_35, %c2_36] : memref<2x8x512xf32, #tpu.memory_space<vmem>>, vector<1x8x384xf32>
    %43 = vector.shape_cast %42 : vector<1x8x384xf32> to vector<8x384xf32>
    %c1_37 = arith.constant 1 : index
    %c0_38 = arith.constant 0 : index
    %c18_39 = arith.constant 18 : index
    %44 = vector.load %arg1[%c1_37, %c0_38, %c18_39] : memref<2x8x512xf32, #tpu.memory_space<vmem>>, vector<1x8x384xf32>
    %45 = vector.shape_cast %44 : vector<1x8x384xf32> to vector<8x384xf32>
    %46 = tpu.concatenate %43, %45 in 0 : vector<8x384xf32>, vector<8x384xf32> -> vector<16x384xf32>
    %47 = arith.truncf %46 : vector<16x384xf32> to vector<16x384xbf16>
    %c16_40 = arith.constant 16 : index
    %c384_41 = arith.constant 384 : index
    %48 = vector.load %arg5[%c16_40, %c384_41] : memref<80x768xbf16, #tpu.memory_space<vmem>>, vector<16x384xbf16>
    tpu.vector_store %arg5[%c16_40, %c384_41], %47 {strides = array<i32>} : memref<80x768xbf16, #tpu.memory_space<vmem>>, vector<16x384xbf16>,
    %c1_42 = arith.constant 1 : index
    %c0_43 = arith.constant 0 : index
    %c19_44 = arith.constant 19 : index
    %49 = vector.load %arg1[%c1_42, %c0_43, %c19_44] : memref<2x8x512xf32, #tpu.memory_space<vmem>>, vector<1x8x384xf32>
    %50 = vector.shape_cast %49 : vector<1x8x384xf32> to vector<8x384xf32>
    %c1_45 = arith.constant 1 : index
    %c0_46 = arith.constant 0 : index
    %c20_47 = arith.constant 20 : index
    %51 = vector.load %arg1[%c1_45, %c0_46, %c20_47] : memref<2x8x512xf32, #tpu.memory_space<vmem>>, vector<1x8x384xf32>
    %52 = vector.shape_cast %51 : vector<1x8x384xf32> to vector<8x384xf32>
    %53 = tpu.concatenate %50, %52 in 0 : vector<8x384xf32>, vector<8x384xf32> -> vector<16x384xf32>
    %54 = arith.truncf %53 : vector<16x384xf32> to vector<16x384xbf16>
    %c32_48 = arith.constant 32 : index
    %c384_49 = arith.constant 384 : index
    %55 = vector.load %arg5[%c32_48, %c384_49] : memref<80x768xbf16, #tpu.memory_space<vmem>>, vector<16x384xbf16>
    tpu.vector_store %arg5[%c32_48, %c384_49], %54 {strides = array<i32>} : memref<80x768xbf16, #tpu.memory_space<vmem>>, vector<16x384xbf16>,
    %c1_50 = arith.constant 1 : index
    %c0_51 = arith.constant 0 : index
    %c36_52 = arith.constant 36 : index
    %56 = vector.load %arg1[%c1_50, %c0_51, %c36_52] : memref<2x8x512xf32, #tpu.memory_space<vmem>>, vector<1x8x384xf32>
    %57 = vector.shape_cast %56 : vector<1x8x384xf32> to vector<8x384xf32>
    %c1_53 = arith.constant 1 : index
    %c0_54 = arith.constant 0 : index
    %c37_55 = arith.constant 37 : index
    %58 = vector.load %arg1[%c1_53, %c0_54, %c37_55] : memref<2x8x512xf32, #tpu.memory_space<vmem>>, vector<1x8x384xf32>
    %59 = vector.shape_cast %58 : vector<1x8x384xf32> to vector<8x384xf32>
    %60 = tpu.concatenate %57, %59 in 0 : vector<8x384xf32>, vector<8x384xf32> -> vector<16x384xf32>
    %61 = arith.truncf %60 : vector<16x384xf32> to vector<16x384xbf16>
    %c48_56 = arith.constant 48 : index
    %c384_57 = arith.constant 384 : index
    %62 = vector.load %arg5[%c48_56, %c384_57] : memref<80x768xbf16, #tpu.memory_space<vmem>>, vector<16x384xbf16>
    tpu.vector_store %arg5[%c48_56, %c384_57], %61 {strides = array<i32>} : memref<80x768xbf16, #tpu.memory_space<vmem>>, vector<16x384xbf16>,
    %c1_58 = arith.constant 1 : index
    %c0_59 = arith.constant 0 : index
    %c38_60 = arith.constant 38 : index
    %63 = vector.load %arg1[%c1_58, %c0_59, %c38_60] : memref<2x8x512xf32, #tpu.memory_space<vmem>>, vector<1x8x384xf32>
    %64 = vector.shape_cast %63 : vector<1x8x384xf32> to vector<8x384xf32>
    %c1_61 = arith.constant 1 : index
    %c0_62 = arith.constant 0 : index
    %c0_63 = arith.constant 0 : index
    %65 = vector.load %arg1[%c1_61, %c0_62, %c0_63] : memref<2x8x512xf32, #tpu.memory_space<vmem>>, vector<1x8x384xf32>
    %66 = vector.shape_cast %65 : vector<1x8x384xf32> to vector<8x384xf32>
    %67 = tpu.concatenate %64, %66 in 0 : vector<8x384xf32>, vector<8x384xf32> -> vector<16x384xf32>
    %68 = arith.truncf %67 : vector<16x384xf32> to vector<16x384xbf16>
    %c64_64 = arith.constant 64 : index
    %c384_65 = arith.constant 384 : index
    %69 = vector.load %arg5[%c64_64, %c384_65] : memref<80x768xbf16, #tpu.memory_space<vmem>>, vector<16x384xbf16>
    tpu.vector_store %arg5[%c64_64, %c384_65], %68 {strides = array<i32>} : memref<80x768xbf16, #tpu.memory_space<vmem>>, vector<16x384xbf16>,
    %c0_66 = arith.constant 0 : index
    %c0_67 = arith.constant 0 : index
    %70 = vector.load %arg2[%c0_66, %c0_67] : memref<8x80xbf16, #tpu.memory_space<vmem>>, vector<8x80xbf16>
    %c0_68 = arith.constant 0 : index
    %c0_69 = arith.constant 0 : index
    %71 = vector.load %arg5[%c0_68, %c0_69] : memref<80x768xbf16, #tpu.memory_space<vmem>>, vector<80x768xbf16>
    %cst = arith.constant dense<0.000000e+00> : vector<8x768xf32>
    %72 = tpu.matmul %70, %71, %cst {dimension_numbers = #tpu.dot_dimension_numbers<[1], [0], [0], [1], [0, 0, 1, 1], [], []>} : vector<8x80xbf16>, vector<80x768xbf16>, vector<8x768xf32> -> vector<8x768xf32>
    %c0_70 = arith.constant 0 : index
    %c0_71 = arith.constant 0 : index
    %73 = vector.load %arg3[%c0_70, %c0_71] : memref<8x1xf32, #tpu.memory_space<vmem>>, vector<8x1xf32>
    %74 = vector.broadcast %73 : vector<8x1xf32> to vector<8x768xf32>
    %75 = arith.addf %72, %74 : vector<8x768xf32>
    %cst_72 = arith.constant 0.00999999977 : f32
    %76 = vector.broadcast %cst_72 : f32 to vector<8x768xf32>
    %77 = arith.mulf %76, %75 : vector<8x768xf32>
    %78 = arith.maximumf %75, %77 : vector<8x768xf32>
    %79 = vector.extract_strided_slice %78 {offsets = [0, 0], sizes = [8, 384], strides = [1, 1]} : vector<8x768xf32> to vector<8x384xf32>
    %c0_73 = arith.constant 0 : index
    %c0_74 = arith.constant 0 : index
    %c0_75 = arith.constant 0 : index
    %80 = vector.load %arg4[%c0_73, %c0_74, %c0_75] : memref<2x8x384xf32, #tpu.memory_space<vmem>>, vector<1x8x384xf32>
    %81 = vector.shape_cast %80 : vector<1x8x384xf32> to vector<8x384xf32>
    %82 = vector.shape_cast %79 : vector<8x384xf32> to vector<1x8x384xf32>
    tpu.vector_store %arg4[%c0_73, %c0_74, %c0_75], %82 {strides = array<i32>} : memref<2x8x384xf32, #tpu.memory_space<vmem>>, vector<1x8x384xf32>,
    %83 = vector.extract_strided_slice %78 {offsets = [0, 384], sizes = [8, 384], strides = [1, 1]} : vector<8x768xf32> to vector<8x384xf32>
    %c1_76 = arith.constant 1 : index
    %c0_77 = arith.constant 0 : index
    %c0_78 = arith.constant 0 : index
    %84 = vector.load %arg4[%c1_76, %c0_77, %c0_78] : memref<2x8x384xf32, #tpu.memory_space<vmem>>, vector<1x8x384xf32>
    %85 = vector.shape_cast %84 : vector<1x8x384xf32> to vector<8x384xf32>
    %86 = vector.shape_cast %83 : vector<8x384xf32> to vector<1x8x384xf32>
    tpu.vector_store %arg4[%c1_76, %c0_77, %c0_78], %86 {strides = array<i32>} : memref<2x8x384xf32, #tpu.memory_space<vmem>>, vector<1x8x384xf32>,
    return
  }
  func.func @transform_0(%arg0: i32) -> (i32, i32, i32) {
    %c0_i32 = arith.constant 0 : i32
    %c0_i32_0 = arith.constant 0 : i32
    %c0_i32_1 = arith.constant 0 : i32
    return %arg0, %c0_i32, %c0_i32_0 : i32, i32, i32
  }
  func.func @transform_1(%arg0: i32) -> (i32, i32) {
    %c0_i32 = arith.constant 0 : i32
    %c0_i32_0 = arith.constant 0 : i32
    %c0_i32_1 = arith.constant 0 : i32
    return %c0_i32, %c0_i32_0 : i32, i32
  }
  func.func @transform_2(%arg0: i32) -> (i32, i32) {
    %c0_i32 = arith.constant 0 : i32
    %c0_i32_0 = arith.constant 0 : i32
    %c0_i32_1 = arith.constant 0 : i32
    return %c0_i32, %c0_i32_0 : i32, i32
  }
  func.func @transform_3(%arg0: i32) -> (i32, i32, i32) {
    %c0_i32 = arith.constant 0 : i32
    %c0_i32_0 = arith.constant 0 : i32
    %c0_i32_1 = arith.constant 0 : i32
    return %arg0, %c0_i32, %c0_i32_0 : i32, i32, i32
  }
}

</mosaic_0001>

<llo_original>
// kernel: tpu_custom_call.1
$region0: #{tpu_custom_call.1}
  #allocation0 [shape = 'u32[]', space=smem, size = 0x4, offset = 0x4, fixed_abs, tag = 'smem constant byte address 0x4 - core index']
  #allocation1 [shape = 'u32[144,128]{1,0:T(1,128)}', space=vmem, size = 0x12000, scoped, tag = 'internal scratch']
  #allocation2 [shape = 'bf16[80,768]{1,0:T(16,128)(2,1)}', space=vmem, size = 0x1e000, scoped, tag = 'scratch operand']
  %s0 = inlined_call_operand.hbm [shape: f32[2,8,512], index: 0, kind: input, shape index: {}]
  %s1 = inlined_call_operand.vmem [shape: bf16[8,80], index: 1, kind: input, shape index: {}]
  %s2 = inlined_call_operand.vmem [shape: f32[8,1], index: 2, kind: input, shape index: {}]
  %s3 = inlined_call_operand.hbm [shape: f32[2,8,384], index: 3, kind: output, shape index: {}]
  %s4 = sld [smem:[#allocation0]]
  $region26: #{tpu_custom_call.1} parent=0
    _
  %s6 = ssub.s32 1, %s4
  %s7 = scalar_select 0, %s6, %s4
  $region1: #{tpu_custom_call.1} parent=0
    #allocation3 [shape = 'u8[32768]{0}', space=vmem, size = 0x8000, scoped, tag = 'input window, operand 0, single buffered']
    #allocation4 [shape = 's32[1]{0}', space=sflag, size = 0x4, scoped, tag = 'scoped memory for tpu_custom_call.1']
    #allocation5 [shape = 's32[1]{0}', space=sflag, size = 0x4, scoped, tag = 'scoped memory for tpu_custom_call.1']
    #allocation6 [shape = 'u8[24576]{0}', space=vmem, size = 0x6000, scoped, tag = 'output window, operand 0, single buffered']
    %8 = vsyncpa [#allocation4], 0
    %9 = vsyncpa [#allocation5], 0
    // Predicated region
    $region2: #{tpu_custom_call.1} parent=1 // pred_check
      _
    $region3: #{tpu_custom_call.1} parent=1 // pred_check_branch
      %11 = sbr.rel (0) target = $region5
    $region4: #{tpu_custom_call.1} parent=1 // pred_region
      %s13 = ssub.s32 1024, 1024
      %14 = vsyncadd [#allocation4], %s13
      %s15 = sshll.u32 [#allocation3], 4
      %s16 = int_to_ptr.vmem [resolvable:$true] %s15
      %21 = dma.hbm_to_vmem [thread:$0]  %s0, 1024, %s16, [#allocation4], 512, 512, 32
    $region5: #{tpu_custom_call.1} parent=1 // pred_fallthru
      _
    // Predicated region
    $region6: #{tpu_custom_call.1} parent=1 // pred_check
      _
    $region7: #{tpu_custom_call.1} parent=1 // pred_check_branch
      %23 = sbr.rel (0) target = $region9
    $region8: #{tpu_custom_call.1} parent=1 // pred_region
      _
    $region9: #{tpu_custom_call.1} parent=1 // pred_fallthru
      _
    // Predicated region
    $region10: #{tpu_custom_call.1} parent=1 // pred_check
      _
    $region11: #{tpu_custom_call.1} parent=1 // pred_check_branch
      %25 = sbr.rel (0) target = $region13
    $region12: #{tpu_custom_call.1} parent=1 // pred_region
      _
    $region13: #{tpu_custom_call.1} parent=1 // pred_fallthru
      _
    // Predicated region
    $region14: #{tpu_custom_call.1} parent=1 // pred_check
      _
    $region15: #{tpu_custom_call.1} parent=1 // pred_check_branch
      %27 = sbr.rel (0) target = $region17
    $region16: #{tpu_custom_call.1} parent=1 // pred_region
      %28 = dma.done [#allocation4], 1024
    $region17: #{tpu_custom_call.1} parent=1 // pred_fallthru
      _
    %v30 = vld [vmem:[#allocation3] sm:$0xff]
    %v31 = vld [vmem:[#allocation3 + $0x8] sm:$0xff]
    %v32 = vld [vmem:[#allocation3 + $0x10] sm:$0xff]
    %v33 = vld [vmem:[#allocation3 + $0x18] sm:$0xff]
    %38 = vrot.lane.b32.xlu0 %v30, 127
    %v39 = vpop.permute.xlu0 %38
    %40 = vrot.lane.b32.xlu0 %v31, 127
    %v41 = vpop.permute.xlu0 %40
    %42 = vrot.lane.b32.xlu0 %v32, 127
    %v43 = vpop.permute.xlu0 %42
    %44 = vrot.lane.b32.xlu0 %v33, 127
    %v45 = vpop.permute.xlu0 %44
    %vm46 = vcmask 1039360
    %v47 = vsel %vm46, %v39, %v41
    %v48 = vsel %vm46, %v41, %v43
    %v49 = vsel %vm46, %v43, %v45
    %v53 = vpack.c.bf16 %v47, %v30
    %v54 = vpack.c.bf16 %v48, %v31
    %v55 = vpack.c.bf16 %v49, %v32
    %56 = vst [vmem:[#allocation2] sm:$0xff] %v53
    %57 = vst [vmem:[#allocation2 + $0x8] sm:$0xff] %v54
    %58 = vst [vmem:[#allocation2 + $0x10] sm:$0xff] %v55
    %v59 = vld [vmem:[#allocation3] sm:$0xff]
    %v60 = vld [vmem:[#allocation3 + $0x8] sm:$0xff]
    %v61 = vld [vmem:[#allocation3 + $0x10] sm:$0xff]
    %v62 = vld [vmem:[#allocation3 + $0x18] sm:$0xff]
    %67 = vrot.lane.b32.xlu0 %v59, 112
    %v68 = vpop.permute.xlu0 %67
    %69 = vrot.lane.b32.xlu0 %v60, 112
    %v70 = vpop.permute.xlu0 %69
    %71 = vrot.lane.b32.xlu0 %v61, 112
    %v72 = vpop.permute.xlu0 %71
    %73 = vrot.lane.b32.xlu0 %v62, 112
    %v74 = vpop.permute.xlu0 %73
    %vm75 = vcmask 916480
    %v76 = vsel %vm75, %v68, %v70
    %v77 = vsel %vm75, %v70, %v72
    %v78 = vsel %vm75, %v72, %v74
    %v83 = vpack.c.bf16 %v76, %v59
    %v84 = vpack.c.bf16 %v77, %v60
    %v85 = vpack.c.bf16 %v78, %v61
    %v86 = vpack.c.bf16 %v74, %v62
    %91 = vrot.lane.b32.xlu0 %v83, 126
    %v92 = vpop.permute.xlu0 %91
    %93 = vrot.lane.b32.xlu0 %v84, 126
    %v94 = vpop.permute.xlu0 %93
    %95 = vrot.lane.b32.xlu0 %v85, 126
    %v96 = vpop.permute.xlu0 %95
    %97 = vrot.lane.b32.xlu0 %v86, 126
    %v98 = vpop.permute.xlu0 %97
    %vm99 = vcmask 1031168
    %v100 = vsel %vm99, %v92, %v94
    %v101 = vsel %vm99, %v94, %v96
    %v102 = vsel %vm99, %v96, %v98
    %106 = vst [vmem:[#allocation2 + $0x30] sm:$0xff] %v100
    %107 = vst [vmem:[#allocation2 + $0x38] sm:$0xff] %v101
    %108 = vst [vmem:[#allocation2 + $0x40] sm:$0xff] %v102
    %v109 = vld [vmem:[#allocation3] sm:$0xff]
    %v110 = vld [vmem:[#allocation3 + $0x8] sm:$0xff]
    %v111 = vld [vmem:[#allocation3 + $0x10] sm:$0xff]
    %v112 = vld [vmem:[#allocation3 + $0x18] sm:$0xff]
    %117 = vrot.lane.b32.xlu0 %v109, 127
    %v118 = vpop.permute.xlu0 %117
    %119 = vrot.lane.b32.xlu0 %v110, 127
    %v120 = vpop.permute.xlu0 %119
    %121 = vrot.lane.b32.xlu0 %v111, 127
    %v122 = vpop.permute.xlu0 %121
    %123 = vrot.lane.b32.xlu0 %v112, 127
    %v124 = vpop.permute.xlu0 %123
    %v125 = vsel %vm46, %v118, %v120
    %v126 = vsel %vm46, %v120, %v122
    %v127 = vsel %vm46, %v122, %v124
    %v132 = vpack.c.bf16 %v125, %v109
    %v133 = vpack.c.bf16 %v126, %v110
    %v134 = vpack.c.bf16 %v127, %v111
    %v135 = vpack.c.bf16 %v124, %v112
    %140 = vrot.lane.b32.xlu0 %v132, 109
    %v141 = vpop.permute.xlu0 %140
    %142 = vrot.lane.b32.xlu0 %v133, 109
    %v143 = vpop.permute.xlu0 %142
    %144 = vrot.lane.b32.xlu0 %v134, 109
    %v145 = vpop.permute.xlu0 %144
    %146 = vrot.lane.b32.xlu0 %v135, 109
    %v147 = vpop.permute.xlu0 %146
    %vm148 = vcmask 891904
    %v149 = vsel %vm148, %v141, %v143
    %v150 = vsel %vm148, %v143, %v145
    %v151 = vsel %vm148, %v145, %v147
    %155 = vst [vmem:[#allocation2 + $0x60] sm:$0xff] %v149
    %156 = vst [vmem:[#allocation2 + $0x68] sm:$0xff] %v150
    %157 = vst [vmem:[#allocation2 + $0x70] sm:$0xff] %v151
    %v158 = vld [vmem:[#allocation3] sm:$0xff]
    %v159 = vld [vmem:[#allocation3 + $0x8] sm:$0xff]
    %v160 = vld [vmem:[#allocation3 + $0x10] sm:$0xff]
    %v161 = vld [vmem:[#allocation3 + $0x18] sm:$0xff]
    %166 = vrot.lane.b32.xlu0 %v158, 127
    %v167 = vpop.permute.xlu0 %166
    %168 = vrot.lane.b32.xlu0 %v159, 127
    %v169 = vpop.permute.xlu0 %168
    %170 = vrot.lane.b32.xlu0 %v160, 127
    %v171 = vpop.permute.xlu0 %170
    %172 = vrot.lane.b32.xlu0 %v161, 127
    %v173 = vpop.permute.xlu0 %172
    %v174 = vsel %vm46, %v167, %v169
    %v175 = vsel %vm46, %v169, %v171
    %v176 = vsel %vm46, %v171, %v173
    %v181 = vpack.c.bf16 %v174, %v158
    %v182 = vpack.c.bf16 %v175, %v159
    %v183 = vpack.c.bf16 %v176, %v160
    %v184 = vpack.c.bf16 %v173, %v161
    %189 = vrot.lane.b32.xlu0 %v181, 92
    %v190 = vpop.permute.xlu0 %189
    %191 = vrot.lane.b32.xlu0 %v182, 92
    %v192 = vpop.permute.xlu0 %191
    %193 = vrot.lane.b32.xlu0 %v183, 92
    %v194 = vpop.permute.xlu0 %193
    %195 = vrot.lane.b32.xlu0 %v184, 92
    %v196 = vpop.permute.xlu0 %195
    %vm197 = vcmask 752640
    %v198 = vsel %vm197, %v190, %v192
    %v199 = vsel %vm197, %v192, %v194
    %v200 = vsel %vm197, %v194, %v196
    %204 = vst [vmem:[#allocation2 + $0x90] sm:$0xff] %v198
    %205 = vst [vmem:[#allocation2 + $0x98] sm:$0xff] %v199
    %206 = vst [vmem:[#allocation2 + $0xa0] sm:$0xff] %v200
    %v207 = vld [vmem:[#allocation3] sm:$0xff]
    %v208 = vld [vmem:[#allocation3 + $0x8] sm:$0xff]
    %v209 = vld [vmem:[#allocation3 + $0x10] sm:$0xff]
    %v210 = vld [vmem:[#allocation3 + $0x18] sm:$0xff]
    %214 = vrot.lane.b32.xlu0 %v207, 38
    %v215 = vpop.permute.xlu0 %214
    %216 = vrot.lane.b32.xlu0 %v208, 38
    %v217 = vpop.permute.xlu0 %216
    %218 = vrot.lane.b32.xlu0 %v209, 38
    %v219 = vpop.permute.xlu0 %218
    %vm220 = vcmask 310272
    %v221 = vsel %vm220, %v215, %v217
    %v222 = vsel %vm220, %v217, %v219
    %v227 = vpack.c.bf16 %v215, %v207
    %v228 = vpack.c.bf16 %v221, %v208
    %v229 = vpack.c.bf16 %v222, %v209
    %v230 = vpack.c.bf16 %v219, %v210
    %235 = vrot.lane.b32.xlu0 %v227, 90
    %v236 = vpop.permute.xlu0 %235
    %237 = vrot.lane.b32.xlu0 %v228, 90
    %v238 = vpop.permute.xlu0 %237
    %239 = vrot.lane.b32.xlu0 %v229, 90
    %v240 = vpop.permute.xlu0 %239
    %241 = vrot.lane.b32.xlu0 %v230, 90
    %v242 = vpop.permute.xlu0 %241
    %vm243 = vcmask 736256
    %v244 = vsel %vm243, %v236, %v238
    %v245 = vsel %vm243, %v238, %v240
    %v246 = vsel %vm243, %v240, %v242
    %250 = vst [vmem:[#allocation2 + $0xc0] sm:$0xff] %v244
    %251 = vst [vmem:[#allocation2 + $0xc8] sm:$0xff] %v245
    %252 = vst [vmem:[#allocation2 + $0xd0] sm:$0xff] %v246
    %s253 = scalar_lea.vmem [#allocation3], 32
    %v254 = vld [vmem:[%s253] sm:$0xff]
    %v255 = vld [vmem:[%s253 + $0x8] sm:$0xff]
    %v256 = vld [vmem:[%s253 + $0x10] sm:$0xff]
    %v257 = vld [vmem:[%s253 + $0x18] sm:$0xff]
    %262 = vrot.lane.b32.xlu0 %v254, 127
    %v263 = vpop.permute.xlu0 %262
    %264 = vrot.lane.b32.xlu0 %v255, 127
    %v265 = vpop.permute.xlu0 %264
    %266 = vrot.lane.b32.xlu0 %v256, 127
    %v267 = vpop.permute.xlu0 %266
    %268 = vrot.lane.b32.xlu0 %v257, 127
    %v269 = vpop.permute.xlu0 %268
    %v270 = vsel %vm46, %v263, %v265
    %v271 = vsel %vm46, %v265, %v267
    %v272 = vsel %vm46, %v267, %v269
    %v276 = vpack.c.bf16 %v270, %v254
    %v277 = vpack.c.bf16 %v271, %v255
    %v278 = vpack.c.bf16 %v272, %v256
    %279 = vst [vmem:[#allocation2 + $0x18] sm:$0xff] %v276
    %280 = vst [vmem:[#allocation2 + $0x20] sm:$0xff] %v277
    %281 = vst [vmem:[#allocation2 + $0x28] sm:$0xff] %v278
    %v282 = vld [vmem:[%s253] sm:$0xff]
    %v283 = vld [vmem:[%s253 + $0x8] sm:$0xff]
    %v284 = vld [vmem:[%s253 + $0x10] sm:$0xff]
    %v285 = vld [vmem:[%s253 + $0x18] sm:$0xff]
    %290 = vrot.lane.b32.xlu0 %v282, 112
    %v291 = vpop.permute.xlu0 %290
    %292 = vrot.lane.b32.xlu0 %v283, 112
    %v293 = vpop.permute.xlu0 %292
    %294 = vrot.lane.b32.xlu0 %v284, 112
    %v295 = vpop.permute.xlu0 %294
    %296 = vrot.lane.b32.xlu0 %v285, 112
    %v297 = vpop.permute.xlu0 %296
    %v298 = vsel %vm75, %v291, %v293
    %v299 = vsel %vm75, %v293, %v295
    %v300 = vsel %vm75, %v295, %v297
    %v305 = vpack.c.bf16 %v298, %v282
    %v306 = vpack.c.bf16 %v299, %v283
    %v307 = vpack.c.bf16 %v300, %v284
    %v308 = vpack.c.bf16 %v297, %v285
    %313 = vrot.lane.b32.xlu0 %v305, 126
    %v314 = vpop.permute.xlu0 %313
    %315 = vrot.lane.b32.xlu0 %v306, 126
    %v316 = vpop.permute.xlu0 %315
    %317 = vrot.lane.b32.xlu0 %v307, 126
    %v318 = vpop.permute.xlu0 %317
    %319 = vrot.lane.b32.xlu0 %v308, 126
    %v320 = vpop.permute.xlu0 %319
    %v321 = vsel %vm99, %v314, %v316
    %v322 = vsel %vm99, %v316, %v318
    %v323 = vsel %vm99, %v318, %v320
    %327 = vst [vmem:[#allocation2 + $0x48] sm:$0xff] %v321
    %328 = vst [vmem:[#allocation2 + $0x50] sm:$0xff] %v322
    %329 = vst [vmem:[#allocation2 + $0x58] sm:$0xff] %v323
    %v330 = vld [vmem:[%s253] sm:$0xff]
    %v331 = vld [vmem:[%s253 + $0x8] sm:$0xff]
    %v332 = vld [vmem:[%s253 + $0x10] sm:$0xff]
    %v333 = vld [vmem:[%s253 + $0x18] sm:$0xff]
    %338 = vrot.lane.b32.xlu0 %v330, 127
    %v339 = vpop.permute.xlu0 %338
    %340 = vrot.lane.b32.xlu0 %v331, 127
    %v341 = vpop.permute.xlu0 %340
    %342 = vrot.lane.b32.xlu0 %v332, 127
    %v343 = vpop.permute.xlu0 %342
    %344 = vrot.lane.b32.xlu0 %v333, 127
    %v345 = vpop.permute.xlu0 %344
    %v346 = vsel %vm46, %v339, %v341
    %v347 = vsel %vm46, %v341, %v343
    %v348 = vsel %vm46, %v343, %v345
    %v353 = vpack.c.bf16 %v346, %v330
    %v354 = vpack.c.bf16 %v347, %v331
    %v355 = vpack.c.bf16 %v348, %v332
    %v356 = vpack.c.bf16 %v345, %v333
    %361 = vrot.lane.b32.xlu0 %v353, 109
    %v362 = vpop.permute.xlu0 %361
    %363 = vrot.lane.b32.xlu0 %v354, 109
    %v364 = vpop.permute.xlu0 %363
    %365 = vrot.lane.b32.xlu0 %v355, 109
    %v366 = vpop.permute.xlu0 %365
    %367 = vrot.lane.b32.xlu0 %v356, 109
    %v368 = vpop.permute.xlu0 %367
    %v369 = vsel %vm148, %v362, %v364
    %v370 = vsel %vm148, %v364, %v366
    %v371 = vsel %vm148, %v366, %v368
    %375 = vst [vmem:[#allocation2 + $0x78] sm:$0xff] %v369
    %376 = vst [vmem:[#allocation2 + $0x80] sm:$0xff] %v370
    %377 = vst [vmem:[#allocation2 + $0x88] sm:$0xff] %v371
    %v378 = vld [vmem:[%s253] sm:$0xff]
    %v379 = vld [vmem:[%s253 + $0x8] sm:$0xff]
    %v380 = vld [vmem:[%s253 + $0x10] sm:$0xff]
    %v381 = vld [vmem:[%s253 + $0x18] sm:$0xff]
    %386 = vrot.lane.b32.xlu0 %v378, 127
    %v387 = vpop.permute.xlu0 %386
    %388 = vrot.lane.b32.xlu0 %v379, 127
    %v389 = vpop.permute.xlu0 %388
    %390 = vrot.lane.b32.xlu0 %v380, 127
    %v391 = vpop.permute.xlu0 %390
    %392 = vrot.lane.b32.xlu0 %v381, 127
    %v393 = vpop.permute.xlu0 %392
    %v394 = vsel %vm46, %v387, %v389
    %v395 = vsel %vm46, %v389, %v391
    %v396 = vsel %vm46, %v391, %v393
    %v401 = vpack.c.bf16 %v394, %v378
    %v402 = vpack.c.bf16 %v395, %v379
    %v403 = vpack.c.bf16 %v396, %v380
    %v404 = vpack.c.bf16 %v393, %v381
    %409 = vrot.lane.b32.xlu0 %v401, 92
    %v410 = vpop.permute.xlu0 %409
    %411 = vrot.lane.b32.xlu0 %v402, 92
    %v412 = vpop.permute.xlu0 %411
    %413 = vrot.lane.b32.xlu0 %v403, 92
    %v414 = vpop.permute.xlu0 %413
    %415 = vrot.lane.b32.xlu0 %v404, 92
    %v416 = vpop.permute.xlu0 %415
    %v417 = vsel %vm197, %v410, %v412
    %v418 = vsel %vm197, %v412, %v414
    %v419 = vsel %vm197, %v414, %v416
    %423 = vst [vmem:[#allocation2 + $0xa8] sm:$0xff] %v417
    %424 = vst [vmem:[#allocation2 + $0xb0] sm:$0xff] %v418
    %425 = vst [vmem:[#allocation2 + $0xb8] sm:$0xff] %v419
    %v426 = vld [vmem:[%s253] sm:$0xff]
    %v427 = vld [vmem:[%s253 + $0x8] sm:$0xff]
    %v428 = vld [vmem:[%s253 + $0x10] sm:$0xff]
    %v429 = vld [vmem:[%s253 + $0x18] sm:$0xff]
    %433 = vrot.lane.b32.xlu0 %v426, 38
    %v434 = vpop.permute.xlu0 %433
    %435 = vrot.lane.b32.xlu0 %v427, 38
    %v436 = vpop.permute.xlu0 %435
    %437 = vrot.lane.b32.xlu0 %v428, 38
    %v438 = vpop.permute.xlu0 %437
    %v439 = vsel %vm220, %v434, %v436
    %v440 = vsel %vm220, %v436, %v438
    %v445 = vpack.c.bf16 %v434, %v426
    %v446 = vpack.c.bf16 %v439, %v427
    %v447 = vpack.c.bf16 %v440, %v428
    %v448 = vpack.c.bf16 %v438, %v429
    %453 = vrot.lane.b32.xlu0 %v445, 90
    %v454 = vpop.permute.xlu0 %453
    %455 = vrot.lane.b32.xlu0 %v446, 90
    %v456 = vpop.permute.xlu0 %455
    %457 = vrot.lane.b32.xlu0 %v447, 90
    %v458 = vpop.permute.xlu0 %457
    %459 = vrot.lane.b32.xlu0 %v448, 90
    %v460 = vpop.permute.xlu0 %459
    %v461 = vsel %vm243, %v454, %v456
    %v462 = vsel %vm243, %v456, %v458
    %v463 = vsel %vm243, %v458, %v460
    %467 = vst [vmem:[#allocation2 + $0xd8] sm:$0xff] %v461
    %468 = vst [vmem:[#allocation2 + $0xe0] sm:$0xff] %v462
    %469 = vst [vmem:[#allocation2 + $0xe8] sm:$0xff] %v463
    %v470 = vld [vmem:[%s1] sm:$0xf]
    %v471 = vld [vmem:[#allocation2] sm:$0xff]
    %v472 = vld [vmem:[#allocation2 + $0x8] sm:$0xff]
    %v473 = vld [vmem:[#allocation2 + $0x10] sm:$0xff]
    %v474 = vld [vmem:[#allocation2 + $0x18] sm:$0xff]
    %v475 = vld [vmem:[#allocation2 + $0x20] sm:$0xff]
    %v476 = vld [vmem:[#allocation2 + $0x28] sm:$0xff]
    %v477 = vld [vmem:[#allocation2 + $0x30] sm:$0xff]
    %v478 = vld [vmem:[#allocation2 + $0x38] sm:$0xff]
    %v479 = vld [vmem:[#allocation2 + $0x40] sm:$0xff]
    %v480 = vld [vmem:[#allocation2 + $0x48] sm:$0xff]
    %v481 = vld [vmem:[#allocation2 + $0x50] sm:$0xff]
    %v482 = vld [vmem:[#allocation2 + $0x58] sm:$0xff]
    %v483 = vld [vmem:[#allocation2 + $0x60] sm:$0xff]
    %v484 = vld [vmem:[#allocation2 + $0x68] sm:$0xff]
    %v485 = vld [vmem:[#allocation2 + $0x70] sm:$0xff]
    %v486 = vld [vmem:[#allocation2 + $0x78] sm:$0xff]
    %v487 = vld [vmem:[#allocation2 + $0x80] sm:$0xff]
    %v488 = vld [vmem:[#allocation2 + $0x88] sm:$0xff]
    %v489 = vld [vmem:[#allocation2 + $0x90] sm:$0xff]
    %v490 = vld [vmem:[#allocation2 + $0x98] sm:$0xff]
    %v491 = vld [vmem:[#allocation2 + $0xa0] sm:$0xff]
    %v492 = vld [vmem:[#allocation2 + $0xa8] sm:$0xff]
    %v493 = vld [vmem:[#allocation2 + $0xb0] sm:$0xff]
    %v494 = vld [vmem:[#allocation2 + $0xb8] sm:$0xff]
    %v495 = vld [vmem:[#allocation2 + $0xc0] sm:$0xff]
    %v496 = vld [vmem:[#allocation2 + $0xc8] sm:$0xff]
    %v497 = vld [vmem:[#allocation2 + $0xd0] sm:$0xff]
    %v498 = vld [vmem:[#allocation2 + $0xd8] sm:$0xff]
    %v499 = vld [vmem:[#allocation2 + $0xe0] sm:$0xff]
    %v500 = vld [vmem:[#allocation2 + $0xe8] sm:$0xff]
    %v501 = vld [vmem:[%s2] sm:$0xff]
    %503 = vset.pattern.permute.xlu0 0
    %504 = vperm.xlu0 %503, %v501
    %v505 = vpop.permute.xlu0 %504
    %vm507 = vcmask 654336
    %v509 = vsel %vm507, %v470, 0
    %511 = vmatprep.subr.bf16.mxu0 %v472
    %512 = vmatpush1.bf16.msra.mxu0 %v471
    %513 = vmatprep.subr.bf16.mxu0 %v478
    %514 = vmatpush1.bf16.msra.mxu0 %v477
    %515 = vmatprep.subr.bf16.mxu0 %v484
    %516 = vmatpush1.bf16.msra.mxu0 %v483
    %517 = vmatprep.subr.bf16.mxu0 %v490
    %518 = vmatpush1.bf16.msra.mxu0 %v489
    %519 = vmatprep.subr.bf16.mxu0 %v496
    %520 = vmatpush1.bf16.msra.mxu0 %v495
    %521 = vmatprep.subr.bf16.mxu0 0
    %522 = vmatpush1.bf16.msra.mxu0 0
    %523 = vmatprep.subr.bf16.mxu0 0
    %524 = vmatpush1.bf16.msra.mxu0 0
    %525 = vmatprep.subr.bf16.mxu0 0
    %526 = vmatpush1.bf16.msra.mxu0 0
    %527 = vmatprep.subr.bf16.mxu0 0
    %528 = vmatpush1.bf16.msra.mxu0 0
    %529 = vmatprep.subr.bf16.mxu0 0
    %530 = vmatpush1.bf16.msra.mxu0 0
    %531 = vmatprep.subr.bf16.mxu0 0
    %532 = vmatpush1.bf16.msra.mxu0 0
    %533 = vmatprep.subr.bf16.mxu0 0
    %534 = vmatpush1.bf16.msra.mxu0 0
    %535 = vmatprep.subr.bf16.mxu0 0
    %536 = vmatpush1.bf16.msra.mxu0 0
    %537 = vmatprep.subr.bf16.mxu0 0
    %538 = vmatpush1.bf16.msra.mxu0 0
    %539 = vmatprep.subr.bf16.mxu0 0
    %540 = vmatpush1.bf16.msra.mxu0 0
    %541 = vmatprep.subr.bf16.mxu0 0
    %542 = vmatpush1.bf16.msra.mxu0 0
    %543 = vmatprep.mubr.bf16.mxu0 0
    %544 = vmatmul.mubr.bf16.gmra.mrb[0].mxu0 %v509
    %v545 = vpop.f32.mrb[0].mxu0
    %v546 = vadd.f32 %v505, %v545
    %v547 = vpop.f32.mrb[0].mxu0
    %v548 = vadd.f32 %v505, %v547
    %v549 = vpop.f32.mrb[0].mxu0
    %v550 = vpop.f32.mrb[0].mxu0
    %551 = vdwg.mxu0
    %552 = vmatprep.subr.bf16.mxu0 %v474
    %553 = vmatpush1.bf16.msra.mxu0 %v473
    %554 = vmatprep.subr.bf16.mxu0 %v480
    %555 = vmatpush1.bf16.msra.mxu0 %v479
    %556 = vmatprep.subr.bf16.mxu0 %v486
    %557 = vmatpush1.bf16.msra.mxu0 %v485
    %558 = vmatprep.subr.bf16.mxu0 %v492
    %559 = vmatpush1.bf16.msra.mxu0 %v491
    %560 = vmatprep.subr.bf16.mxu0 %v498
    %561 = vmatpush1.bf16.msra.mxu0 %v497
    %562 = vmatprep.subr.bf16.mxu0 0
    %563 = vmatpush1.bf16.msra.mxu0 0
    %564 = vmatprep.subr.bf16.mxu0 0
    %565 = vmatpush1.bf16.msra.mxu0 0
    %566 = vmatprep.subr.bf16.mxu0 0
    %567 = vmatpush1.bf16.msra.mxu0 0
    %568 = vmatprep.subr.bf16.mxu0 0
    %569 = vmatpush1.bf16.msra.mxu0 0
    %570 = vmatprep.subr.bf16.mxu0 0
    %571 = vmatpush1.bf16.msra.mxu0 0
    %572 = vmatprep.subr.bf16.mxu0 0
    %573 = vmatpush1.bf16.msra.mxu0 0
    %574 = vmatprep.subr.bf16.mxu0 0
    %575 = vmatpush1.bf16.msra.mxu0 0
    %576 = vmatprep.subr.bf16.mxu0 0
    %577 = vmatpush1.bf16.msra.mxu0 0
    %578 = vmatprep.subr.bf16.mxu0 0
    %579 = vmatpush1.bf16.msra.mxu0 0
    %580 = vmatprep.subr.bf16.mxu0 0
    %581 = vmatpush1.bf16.msra.mxu0 0
    %582 = vmatprep.subr.bf16.mxu0 0
    %583 = vmatpush1.bf16.msra.mxu0 0
    %584 = vmatprep.mubr.bf16.mxu0 0
    %585 = vmatmul.mubr.bf16.gmra.mrb[0].mxu0 %v509
    %v586 = vpop.f32.mrb[0].mxu0
    %v587 = vadd.f32 %v505, %v586
    %v588 = vpop.f32.mrb[0].mxu0
    %v589 = vadd.f32 %v505, %v588
    %v590 = vpop.f32.mrb[0].mxu0
    %v591 = vpop.f32.mrb[0].mxu0
    %592 = vdwg.mxu0
    %593 = vmatprep.subr.bf16.mxu0 %v476
    %594 = vmatpush1.bf16.msra.mxu0 %v475
    %595 = vmatprep.subr.bf16.mxu0 %v482
    %596 = vmatpush1.bf16.msra.mxu0 %v481
    %597 = vmatprep.subr.bf16.mxu0 %v488
    %598 = vmatpush1.bf16.msra.mxu0 %v487
    %599 = vmatprep.subr.bf16.mxu0 %v494
    %600 = vmatpush1.bf16.msra.mxu0 %v493
    %601 = vmatprep.subr.bf16.mxu0 %v500
    %602 = vmatpush1.bf16.msra.mxu0 %v499
    %603 = vmatprep.subr.bf16.mxu0 0
    %604 = vmatpush1.bf16.msra.mxu0 0
    %605 = vmatprep.subr.bf16.mxu0 0
    %606 = vmatpush1.bf16.msra.mxu0 0
    %607 = vmatprep.subr.bf16.mxu0 0
    %608 = vmatpush1.bf16.msra.mxu0 0
    %609 = vmatprep.subr.bf16.mxu0 0
    %610 = vmatpush1.bf16.msra.mxu0 0
    %611 = vmatprep.subr.bf16.mxu0 0
    %612 = vmatpush1.bf16.msra.mxu0 0
    %613 = vmatprep.subr.bf16.mxu0 0
    %614 = vmatpush1.bf16.msra.mxu0 0
    %615 = vmatprep.subr.bf16.mxu0 0
    %616 = vmatpush1.bf16.msra.mxu0 0
    %617 = vmatprep.subr.bf16.mxu0 0
    %618 = vmatpush1.bf16.msra.mxu0 0
    %619 = vmatprep.subr.bf16.mxu0 0
    %620 = vmatpush1.bf16.msra.mxu0 0
    %621 = vmatprep.subr.bf16.mxu0 0
    %622 = vmatpush1.bf16.msra.mxu0 0
    %623 = vmatprep.subr.bf16.mxu0 0
    %624 = vmatpush1.bf16.msra.mxu0 0
    %625 = vmatprep.mubr.bf16.mxu0 0
    %626 = vmatmul.mubr.bf16.gmra.mrb[0].mxu0 %v509
    %v627 = vpop.f32.mrb[0].mxu0
    %v628 = vadd.f32 %v505, %v627
    %v629 = vpop.f32.mrb[0].mxu0
    %v630 = vadd.f32 %v505, %v629
    %v631 = vpop.f32.mrb[0].mxu0
    %v632 = vpop.f32.mrb[0].mxu0
    %633 = vdwg.mxu0
    %v634 = vmul.f32 %v546, 0.01
    %v635 = vmul.f32 %v548, 0.01
    %v636 = vmul.f32 %v587, 0.01
    %v637 = vmul.f32 %v589, 0.01
    %v638 = vmul.f32 %v628, 0.01
    %v639 = vmul.f32 %v630, 0.01
    %v640 = vmax.f32 %v546, %v634
    %v641 = vmax.f32 %v548, %v635
    %v642 = vmax.f32 %v587, %v636
    %v643 = vmax.f32 %v589, %v637
    %v644 = vmax.f32 %v628, %v638
    %v645 = vmax.f32 %v630, %v639
    %646 = vst [vmem:[#allocation6] sm:$0xff] %v640
    %647 = vst [vmem:[#allocation6 + $0x8] sm:$0xff] %v641
    %648 = vst [vmem:[#allocation6 + $0x10] sm:$0xff] %v642
    %s649 = scalar_lea.vmem [#allocation6], 24
    %650 = vst [vmem:[%s649] sm:$0xff] %v643
    %651 = vst [vmem:[%s649 + $0x8] sm:$0xff] %v644
    %652 = vst [vmem:[%s649 + $0x10] sm:$0xff] %v645
    // Predicated region
    $region18: #{tpu_custom_call.1} parent=1 // pred_check
      _
    $region19: #{tpu_custom_call.1} parent=1 // pred_check_branch
      %654 = sbr.rel (0) target = $region21
    $region20: #{tpu_custom_call.1} parent=1 // pred_region
      %s656 = ssub.s32 768, 768
      %657 = vsyncadd [#allocation5], %s656
      %s658 = sshll.u32 [#allocation6], 4
      %s659 = int_to_ptr.vmem [resolvable:$true] %s658
      %664 = dma.vmem_to_hbm [thread:$0]  %s659, 768, %s3, [#allocation5], 384, 384, 24
    $region21: #{tpu_custom_call.1} parent=1 // pred_fallthru
      _
    // Predicated region
    $region22: #{tpu_custom_call.1} parent=1 // pred_check
      _
    $region23: #{tpu_custom_call.1} parent=1 // pred_check_branch
      %666 = sbr.rel (0) target = $region25
    $region24: #{tpu_custom_call.1} parent=1 // pred_region
      %667 = dma.done [#allocation5], 768
    $region25: #{tpu_custom_call.1} parent=1 // pred_fallthru
      _
    %668 = vsyncpa [#allocation4], 1
    %669 = vsyncpa [#allocation5], 1

</llo_original>
